<compile_context>
chip_gen: v7x
topology: tpu7x:2x2x1
jax: 0.10.0
libtpu: 0.0.40
codegen_flags: <defaults>
</compile_context>

<pallas_src>
import jax
import jax.numpy as jnp
from jax.experimental import pallas as pl
from jax.experimental.pallas import tpu as pltpu


def _se_kernel(x_ref, w1t_ref, w2t_ref, o_ref):
    # x_ref / o_ref : (Bt, C, HW)  activations (channels on sublanes, spatial on lanes)
    # w1t_ref       : (C, C_r)     fc1 weight pre-transposed (torch W1.T), f32
    # w2t_ref       : (C_r, C)     fc2 weight pre-transposed (torch W2.T), f32
    x = x_ref[...]

    # --- squeeze: global average pool over spatial positions (f32 accumulation) ---
    pooled = jnp.mean(x.astype(jnp.float32), axis=2)                    # (Bt, C)

    # --- excitation: fc1 -> ReLU -> fc2 -> sigmoid (f32, no in-kernel transposes) ---
    h = jnp.dot(pooled, w1t_ref[...],
                preferred_element_type=jnp.float32)                     # (Bt, C_r)
    h = jnp.maximum(h, 0.0)
    s = jnp.dot(h, w2t_ref[...],
                preferred_element_type=jnp.float32)                     # (Bt, C)
    s = jax.nn.sigmoid(s)

    # --- scale: broadcast per-channel gate along lanes; big multiply in x.dtype ---
    o_ref[...] = x * s.astype(x.dtype)[:, :, None]


# Conservative per-step tile budget (in + out, double-buffered) that fits the
# scoped-VMEM defaults on v5e/v6e/v7x.
_VMEM_TILE_BUDGET = 24 * 1024 * 1024


def _choose_batch_tile(B, C, HW, itemsize):
    """Largest Bt dividing B whose double-buffered (in + out) tiles fit the
    VMEM budget, while keeping >= 2 grid steps when B >= 2 (pipeline overlap
    and megacore sharding of the batch axis)."""
    best = 1
    for bt in range(1, B + 1):
        if B % bt:
            continue
        steps = B // bt
        if B >= 2 and steps < 2:
            continue
        footprint = 4 * bt * C * HW * itemsize   # (in + out) x double buffer
        if footprint <= _VMEM_TILE_BUDGET:
            best = bt
    return best


def se_block(x_nchw, w1, w2):
    """SE block forward.

    x_nchw : (B, C, H, W)
    w1     : (C//r, C)   fc1 weight (torch nn.Linear layout, no bias)
    w2     : (C, C//r)   fc2 weight (torch nn.Linear layout, no bias)
    Returns (B, C, H, W) in x_nchw.dtype.
    """
    B, C, H, W = x_nchw.shape
    HW = H * W
    C_r = w1.shape[0]
    assert w1.shape == (C_r, C) and w2.shape == (C, C_r)

    # Free reshape (row-major contiguous): NCHW -> (B, C, HW).  No transposes.
    x_flat = x_nchw.reshape(B, C, HW)

    itemsize = jnp.dtype(x_nchw.dtype).itemsize
    bt = _choose_batch_tile(B, C, HW, itemsize)
    grid = (B // bt,)
    blk = (bt, C, HW)

    # Pre-transpose the tiny fc weights once in the wrapper (f32 math in-kernel).
    w1_t = jnp.asarray(w1, dtype=jnp.float32).T    # (C, C_r)
    w2_t = jnp.asarray(w2, dtype=jnp.float32).T    # (C_r, C)

    # Explicit VMEM budget: double-buffered x-in + x-out tiles + weights + slack.
    needed = (4 * bt * C * HW * itemsize
              + 4 * (w1_t.size + w2_t.size) * 4
              + (2 << 20))
    vmem_limit = int(min(max(needed, 32 << 20), 48 << 20))

    out_flat = pl.pallas_call(
        _se_kernel,
        out_shape=jax.ShapeDtypeStruct(x_flat.shape, x_flat.dtype),
        grid_spec=pltpu.PrefetchScalarGridSpec(
            num_scalar_prefetch=0,
            grid=grid,
            in_specs=[
                pl.BlockSpec(blk, lambda b: (b, 0, 0)),
                pl.BlockSpec((C, C_r), lambda b: (0, 0)),
                pl.BlockSpec((C_r, C), lambda b: (0, 0)),
            ],
            out_specs=pl.BlockSpec(blk, lambda b: (b, 0, 0)),
        ),
        compiler_params=pltpu.CompilerParams(
            dimension_semantics=("parallel",),
            vmem_limit_bytes=vmem_limit,
        ),
    )(x_flat, w1_t, w2_t)

    return out_flat.reshape(B, C, H, W)


def _reference(x, w1, w2):
    # Pure-JAX reference mirroring the PyTorch forward (f32).
    f = jnp.mean(x, axis=(2, 3))                 # AdaptiveAvgPool2d((1,1)) + flatten
    f = jnp.maximum(f @ w1.T, 0.0)
    f = jax.nn.sigmoid(f @ w2.T)
    return x * f[:, :, None, None]


if __name__ == "__main__":
    # --- main test: lane-dense spatial (HW = 256 is 128-aligned) ---
    B, C, H, W = 2, 32, 16, 16
    r = 16
    C_r = C // r

    key = jax.random.PRNGKey(0)
    kx, k1, k2 = jax.random.split(key, 3)

    x = jax.random.normal(kx, (B, C, H, W), dtype=jnp.float32)
    w1 = jax.random.normal(k1, (C_r, C), dtype=jnp.float32) * 0.1
    w2 = jax.random.normal(k2, (C, C_r), dtype=jnp.float32) * 0.1

    out = jax.block_until_ready(se_block(x, w1, w2))
    ref = _reference(x, w1, w2)
    assert out.shape == (B, C, H, W)
    assert jnp.allclose(out, ref, atol=1e-5, rtol=1e-5), "f32 mismatch vs reference"

    # --- bf16 activations (halves HBM bytes); gate math stays f32 in-kernel ---
    x_bf16 = x.astype(jnp.bfloat16)
    out_bf16 = jax.block_until_ready(se_block(x_bf16, w1, w2))
    ref_bf16 = _reference(x_bf16.astype(jnp.float32), w1, w2)
    assert out_bf16.dtype == jnp.bfloat16
    assert jnp.allclose(out_bf16.astype(jnp.float32), ref_bf16,
                        atol=5e-2, rtol=5e-2), "bf16 mismatch vs reference"

    # --- small-spatial SE-ResNet-style shape: HW = 49 not 128-aligned, C = 128 ---
    C2, H2, W2 = 128, 7, 7
    k3, k4, k5 = jax.random.split(jax.random.PRNGKey(1), 3)
    x2 = jax.random.normal(k3, (B, C2, H2, W2), dtype=jnp.float32)
    w1b = jax.random.normal(k4, (C2 // r, C2), dtype=jnp.float32) * 0.1
    w2b = jax.random.normal(k5, (C2, C2 // r), dtype=jnp.float32) * 0.1
    out2 = jax.block_until_ready(se_block(x2, w1b, w2b))
    ref2 = _reference(x2, w1b, w2b)
    assert jnp.allclose(out2, ref2, atol=1e-5, rtol=1e-5), "small-spatial mismatch"

    print("KERNEL_OK")
</pallas_src>

<mosaic_0001>
module attributes {stable_mosaic.version = 11 : i64} {
  func.func @_se_kernel(%arg0: i32, %arg1: memref<1x32x256xf32, #tpu.memory_space<vmem>>, %arg2: memref<32x2xf32, #tpu.memory_space<vmem>>, %arg3: memref<2x32xf32, #tpu.memory_space<vmem>>, %arg4: memref<1x32x256xf32, #tpu.memory_space<vmem>>) attributes {dimension_semantics = [#tpu.dimension_semantics<parallel>], iteration_bounds = array<i64: 2>, scalar_prefetch = 0 : i64, scratch_operands = 0 : i64, tpu.core_type = #tpu.core_type<tc>, window_params = [{transform_indices = @transform_0, window_bounds = array<i64: 1, 32, 256>}, {pipeline_mode = #tpu.pipeline_mode<synchronous>, transform_indices = @transform_1, window_bounds = array<i64: 32, 2>}, {pipeline_mode = #tpu.pipeline_mode<synchronous>, transform_indices = @transform_2, window_bounds = array<i64: 2, 32>}, {transform_indices = @transform_3, window_bounds = array<i64: 1, 32, 256>}]} {
    %c0 = arith.constant 0 : index
    %c0_0 = arith.constant 0 : index
    %c0_1 = arith.constant 0 : index
    %0 = vector.load %arg1[%c0, %c0_0, %c0_1] : memref<1x32x256xf32, #tpu.memory_space<vmem>>, vector<1x32x256xf32>
    %cst = arith.constant dense<0.000000e+00> : vector<1x32xf32>
    %1 = vector.multi_reduction <add>, %0, %cst [2] : vector<1x32x256xf32> to vector<1x32xf32>
    %cst_2 = arith.constant 2.560000e+02 : f32
    %2 = vector.broadcast %cst_2 : f32 to vector<1x32xf32>
    %3 = arith.divf %1, %2 : vector<1x32xf32>
    %c0_3 = arith.constant 0 : index
    %c0_4 = arith.constant 0 : index
    %4 = vector.load %arg2[%c0_3, %c0_4] : memref<32x2xf32, #tpu.memory_space<vmem>>, vector<32x2xf32>
    %cst_5 = arith.constant dense<0.000000e+00> : vector<1x2xf32>
    %5 = tpu.matmul %3, %4, %cst_5 {dimension_numbers = #tpu.dot_dimension_numbers<[1], [0], [0], [1], [0, 0, 1, 1], [], []>} : vector<1x32xf32>, vector<32x2xf32>, vector<1x2xf32> -> vector<1x2xf32>
    %cst_6 = arith.constant 0.000000e+00 : f32
    %6 = vector.broadcast %cst_6 : f32 to vector<1x2xf32>
    %7 = arith.maximumf %5, %6 : vector<1x2xf32>
    %c0_7 = arith.constant 0 : index
    %c0_8 = arith.constant 0 : index
    %8 = vector.load %arg3[%c0_7, %c0_8] : memref<2x32xf32, #tpu.memory_space<vmem>>, vector<2x32xf32>
    %cst_9 = arith.constant dense<0.000000e+00> : vector<1x32xf32>
    %9 = tpu.matmul %7, %8, %cst_9 {dimension_numbers = #tpu.dot_dimension_numbers<[1], [0], [0], [1], [0, 0, 1, 1], [], []>} : vector<1x2xf32>, vector<2x32xf32>, vector<1x32xf32> -> vector<1x32xf32>
    %10 = arith.negf %9 : vector<1x32xf32>
    %11 = math.exp %10 : vector<1x32xf32>
    %cst_10 = arith.constant 1.000000e+00 : f32
    %12 = vector.broadcast %cst_10 : f32 to vector<1x32xf32>
    %13 = arith.addf %12, %11 : vector<1x32xf32>
    %14 = arith.divf %12, %13 : vector<1x32xf32>
    %15 = vector.shape_cast %14 : vector<1x32xf32> to vector<1x32x1xf32>
    %16 = vector.broadcast %15 : vector<1x32x1xf32> to vector<1x32x256xf32>
    %17 = arith.mulf %0, %16 : vector<1x32x256xf32>
    %c0_11 = arith.constant 0 : index
    %c0_12 = arith.constant 0 : index
    %c0_13 = arith.constant 0 : index
    %18 = vector.load %arg4[%c0_11, %c0_12, %c0_13] : memref<1x32x256xf32, #tpu.memory_space<vmem>>, vector<1x32x256xf32>
    tpu.vector_store %arg4[%c0_11, %c0_12, %c0_13], %17 {strides = array<i32>} : memref<1x32x256xf32, #tpu.memory_space<vmem>>, vector<1x32x256xf32>,
    return
  }
  func.func @transform_0(%arg0: i32) -> (i32, i32, i32) {
    %c0_i32 = arith.constant 0 : i32
    %c0_i32_0 = arith.constant 0 : i32
    %c0_i32_1 = arith.constant 0 : i32
    return %arg0, %c0_i32, %c0_i32_0 : i32, i32, i32
  }
  func.func @transform_1(%arg0: i32) -> (i32, i32) {
    %c0_i32 = arith.constant 0 : i32
    %c0_i32_0 = arith.constant 0 : i32
    %c0_i32_1 = arith.constant 0 : i32
    return %c0_i32, %c0_i32_0 : i32, i32
  }
  func.func @transform_2(%arg0: i32) -> (i32, i32) {
    %c0_i32 = arith.constant 0 : i32
    %c0_i32_0 = arith.constant 0 : i32
    %c0_i32_1 = arith.constant 0 : i32
    return %c0_i32, %c0_i32_0 : i32, i32
  }
  func.func @transform_3(%arg0: i32) -> (i32, i32, i32) {
    %c0_i32 = arith.constant 0 : i32
    %c0_i32_0 = arith.constant 0 : i32
    %c0_i32_1 = arith.constant 0 : i32
    return %arg0, %c0_i32, %c0_i32_0 : i32, i32, i32
  }
}

</mosaic_0001>

<llo_original>
// kernel: tpu_custom_call.1
$region0: #{tpu_custom_call.1}
  #allocation0 [shape = 'u32[]', space=smem, size = 0x4, offset = 0x4, fixed_abs, tag = 'smem constant byte address 0x4 - core index']
  #allocation1 [shape = 'u32[144,128]{1,0:T(1,128)}', space=vmem, size = 0x12000, scoped, tag = 'internal scratch']
  %s0 = inlined_call_operand.hbm [shape: f32[2,32,256], index: 0, kind: input, shape index: {}]
  %s1 = inlined_call_operand.vmem [shape: f32[32,2], index: 1, kind: input, shape index: {}]
  %s2 = inlined_call_operand.vmem [shape: f32[2,32], index: 2, kind: input, shape index: {}]
  %s3 = inlined_call_operand.hbm [shape: f32[2,32,256], index: 3, kind: output, shape index: {}]
  %s4 = sld [smem:[#allocation0]]
  $region49: #{tpu_custom_call.1} parent=0
    _
  %s6 = ssub.s32 1, %s4
  %s7 = scalar_select 0, %s6, %s4
  $region1: #{tpu_custom_call.1} parent=0
    #allocation2 [shape = 'u8[65536]{0}', space=vmem, size = 0x10000, scoped, tag = 'input window, operand 0']
    #allocation3 [shape = 's32[2]{0}', space=sflag, size = 0x8, scoped, tag = 'scoped memory for tpu_custom_call.1']
    #allocation4 [shape = 's32[2]{0}', space=sflag, size = 0x8, scoped, tag = 'scoped memory for tpu_custom_call.1']
    #allocation5 [shape = 'u8[65536]{0}', space=vmem, size = 0x10000, scoped, tag = 'output window, operand 0']
    %8 = vsyncpa [#allocation3], 0
    %s9 = scalar_lea.sflag [#allocation3], 1
    %10 = vsyncpa %s9, 0
    %11 = vsyncpa [#allocation4], 0
    %s12 = scalar_lea.sflag [#allocation4], 1
    %13 = vsyncpa %s12, 0
    loop: start=0, step=1, limit=4
    $region2: #{tpu_custom_call.1} parent=1 // loop_pre_header
      _
    $region3: #{tpu_custom_call.1} parent=1 // loop_header
      %s15 = sphi 0, %s19
      %p16 = scmp.ge.s32.totalorder %s15, 4
      %s25 = sphi 0, %s27
      %s28 = sphi 0, %s25
      %s29 = sphi 0, %s28
      %s45 = sphi 0, %s29
      %s49 = sphi 0, %s49
      %s51 = sphi 0, %s49
      %s52 = sphi 0, %s51
      %s66 = sphi 0, %s52
      %s70 = sphi 0, %s70
      %s72 = sphi 0, %s70
      %s73 = sphi 0, %s72
      %s87 = sphi 0, %s73
      %s93 = sphi 0, %s95
      %s96 = sphi 0, %s93
      %s97 = sphi 0, %s96
      %s113 = sphi 0, %s97
    $region4: #{tpu_custom_call.1} parent=1 // loop_header_branch
      %18 = sbr.rel (%p16) target = $region8
    $region5: #{tpu_custom_call.1} parent=1 // loop_body
      %s20 = ssub.s32 %s15, 1
      %s21 = ssub.s32 %s15, 2
      %s22 = sadd.s32 %s15, 1
      %s23 = ssub.s32 %s15, %s22
      %p24 = scmp.eq.s32.totalorder %s23, 0
      %s26 = sadd.s32 %s25, 1
      %s27 = scalar_select %p24, %s25, %s26
      %p30 = pneg %p24
      %p31 = scmp.eq.s32.totalorder %s15, 1
      %p32 = por %p30, %p31
      %p33 = scmp.ne.s32.totalorder %s25, %s28
      %p34 = scmp.eq.s32.totalorder %s15, 0
      %p35 = por %p33, %p34
      %p36 = scmp.ne.s32.totalorder %s25, %s28
      %p37 = scmp.eq.s32.totalorder %s20, 1
      %p38 = por %p36, %p37
      %p39 = scmp.ne.s32.totalorder %s28, %s29
      %p40 = scmp.eq.s32.totalorder %s20, 0
      %p41 = por %p39, %p40
      %p42 = scmp.ne.s32.totalorder %s28, %s29
      %p43 = scmp.eq.s32.totalorder %s21, 1
      %p44 = por %p42, %p43
      %p46 = scmp.ne.s32.totalorder %s29, %s45
      %p47 = scmp.eq.s32.totalorder %s21, 0
      %p48 = por %p46, %p47
      %s50 = sadd.s32 %s49, 1
      %p53 = scmp.eq.s32.totalorder %s15, 1
      %p54 = scmp.ne.s32.totalorder %s49, %s51
      %p55 = scmp.eq.s32.totalorder %s15, 0
      %p56 = por %p54, %p55
      %p57 = scmp.ne.s32.totalorder %s49, %s51
      %p58 = scmp.eq.s32.totalorder %s20, 1
      %p59 = por %p57, %p58
      %p60 = scmp.ne.s32.totalorder %s51, %s52
      %p61 = scmp.eq.s32.totalorder %s20, 0
      %p62 = por %p60, %p61
      %p63 = scmp.ne.s32.totalorder %s51, %s52
      %p64 = scmp.eq.s32.totalorder %s21, 1
      %p65 = por %p63, %p64
      %p67 = scmp.ne.s32.totalorder %s52, %s66
      %p68 = scmp.eq.s32.totalorder %s21, 0
      %p69 = por %p67, %p68
      %s71 = sadd.s32 %s70, 1
      %p74 = scmp.eq.s32.totalorder %s15, 1
      %p75 = scmp.ne.s32.totalorder %s70, %s72
      %p76 = scmp.eq.s32.totalorder %s15, 0
      %p77 = por %p75, %p76
      %p78 = scmp.ne.s32.totalorder %s70, %s72
      %p79 = scmp.eq.s32.totalorder %s20, 1
      %p80 = por %p78, %p79
      %p81 = scmp.ne.s32.totalorder %s72, %s73
      %p82 = scmp.eq.s32.totalorder %s20, 0
      %p83 = por %p81, %p82
      %p84 = scmp.ne.s32.totalorder %s72, %s73
      %p85 = scmp.eq.s32.totalorder %s21, 1
      %p86 = por %p84, %p85
      %p88 = scmp.ne.s32.totalorder %s73, %s87
      %p89 = scmp.eq.s32.totalorder %s21, 0
      %p90 = por %p88, %p89
      %s91 = ssub.s32 %s15, %s22
      %p92 = scmp.eq.s32.totalorder %s91, 0
      %s94 = sadd.s32 %s93, 1
      %s95 = scalar_select %p92, %s93, %s94
      %p98 = pneg %p92
      %p99 = scmp.eq.s32.totalorder %s15, 1
      %p100 = por %p98, %p99
      %p101 = scmp.ne.s32.totalorder %s93, %s96
      %p102 = scmp.eq.s32.totalorder %s15, 0
      %p103 = por %p101, %p102
      %p104 = scmp.ne.s32.totalorder %s93, %s96
      %p105 = scmp.eq.s32.totalorder %s20, 1
      %p106 = por %p104, %p105
      %p107 = scmp.ne.s32.totalorder %s96, %s97
      %p108 = scmp.eq.s32.totalorder %s20, 0
      %p109 = por %p107, %p108
      %p110 = scmp.ne.s32.totalorder %s96, %s97
      %p111 = scmp.eq.s32.totalorder %s21, 1
      %p112 = por %p110, %p111
      %p114 = scmp.ne.s32.totalorder %s97, %s113
      %p115 = scmp.eq.s32.totalorder %s21, 0
      %p116 = por %p114, %p115
      %p117 = scmp.le.s32.totalorder 1, %s15
      %p118 = scmp.lt.s32.totalorder %s15, 3
      %p119 = pnand %p117, %p118
      %p120 = pneg %p119
      // Predicated region
      $region9: #{tpu_custom_call.1} parent=5 // pred_check
        _
      $region10: #{tpu_custom_call.1} parent=5 // pred_check_branch
        %122 = sbr.rel (%p119) target = $region12
      $region11: #{tpu_custom_call.1} parent=5 // pred_region
        %s123 = ssub.s32 %s15, 1
        // Predicated region
        $region13: #{tpu_custom_call.1} parent=11 // pred_check
          %p124 = pneg %p62
        $region14: #{tpu_custom_call.1} parent=11 // pred_check_branch
          %126 = sbr.rel (%p124) target = $region16
        $region15: #{tpu_custom_call.1} parent=11 // pred_region
          _
        $region16: #{tpu_custom_call.1} parent=11 // pred_fallthru
          _
        // Predicated region
        $region17: #{tpu_custom_call.1} parent=11 // pred_check
          %p127 = pneg %p83
        $region18: #{tpu_custom_call.1} parent=11 // pred_check_branch
          %129 = sbr.rel (%p127) target = $region20
        $region19: #{tpu_custom_call.1} parent=11 // pred_region
          _
        $region20: #{tpu_custom_call.1} parent=11 // pred_fallthru
          _
      $region12: #{tpu_custom_call.1} parent=5 // pred_fallthru
        _
      %p130 = scmp.lt.s32.totalorder %s15, 2
      // Predicated region
      $region21: #{tpu_custom_call.1} parent=5 // pred_check
        %p131 = pneg %p130
      $region22: #{tpu_custom_call.1} parent=5 // pred_check_branch
        %133 = sbr.rel (%p131) target = $region24
      $region23: #{tpu_custom_call.1} parent=5 // pred_region
        // Predicated region
        $region25: #{tpu_custom_call.1} parent=23 // pred_check
          %p134 = pneg %p35
        $region26: #{tpu_custom_call.1} parent=23 // pred_check_branch
          %136 = sbr.rel (%p134) target = $region28
        $region27: #{tpu_custom_call.1} parent=23 // pred_region
          %s137 = sand.u32 %s25, 1
          %s138 = scalar_lea.sflag [#allocation3], %s137
          %s139 = sand.u32 %s25, 1
          %s140 = smul.addr %s139, 64
          %s141 = scalar_lea.vmem [#allocation2], %s140
          %s143 = ssub.s32 1024, 1024
          %144 = vsyncadd %s138, %s143
          %s145 = smul.addr %s15, 8
          %s146 = smul.addr %s145, 128
          %s147 = scalar_lea.hbm %s0, %s146
          %s148 = sshll.u32 %s141, 4
          %s149 = int_to_ptr.vmem [resolvable:$true] %s148
          %154 = dma.hbm_to_vmem [thread:$0]  %s147, 1024, %s149, %s138, 256, 256, 16
        $region28: #{tpu_custom_call.1} parent=23 // pred_fallthru
          _
      $region24: #{tpu_custom_call.1} parent=5 // pred_fallthru
        _
      %p155 = scmp.le.s32.totalorder 1, %s15
      %p156 = scmp.lt.s32.totalorder %s15, 3
      %p157 = pnand %p155, %p156
      %p158 = pneg %p157
      // Predicated region
      $region29: #{tpu_custom_call.1} parent=5 // pred_check
        _
      $region30: #{tpu_custom_call.1} parent=5 // pred_check_branch
        %160 = sbr.rel (%p157) target = $region32
      $region31: #{tpu_custom_call.1} parent=5 // pred_region
        %s161 = ssub.s32 %s15, 1
        %s162 = sand.u32 %s28, 1
        %s163 = scalar_lea.sflag [#allocation3], %s162
        %s164 = sand.u32 %s28, 1
        %s165 = smul.addr %s164, 64
        %s166 = scalar_lea.vmem [#allocation2], %s165
        // Predicated region
        $region33: #{tpu_custom_call.1} parent=31 // pred_check
          %p167 = pneg %p41
        $region34: #{tpu_custom_call.1} parent=31 // pred_check_branch
          %169 = sbr.rel (%p167) target = $region36
        $region35: #{tpu_custom_call.1} parent=31 // pred_region
          %170 = dma.done %s163, 1024
        $region36: #{tpu_custom_call.1} parent=31 // pred_fallthru
          _
        %s171 = sand.u32 %s28, 1
        %s172 = scalar_lea.sflag [#allocation3], %s171
        %s173 = sand.u32 %s28, 1
        %s174 = smul.addr %s173, 64
        %s175 = scalar_lea.vmem [#allocation2], %s174
        %p176 = pneg %p41
        %p177 = pneg %p38
        %p178 = pneg %p62
        %p179 = pneg %p59
        %p180 = pneg %p83
        %p181 = pneg %p80
        %p182 = pneg %p109
        %p183 = pneg %p106
        %s184 = sand.u32 %s96, 1
        %s185 = scalar_lea.sflag [#allocation4], %s184
        %s186 = sand.u32 %s96, 1
        %s187 = smul.addr %s186, 64
        %s188 = scalar_lea.vmem [#allocation5], %s187
        %v189 = vld [vmem:[%s166] sm:$0xff]
        %v190 = vld [vmem:[%s166 + $0x8] sm:$0xff]
        %v191 = vld [vmem:[%s166 + $0x10] sm:$0xff]
        %v192 = vld [vmem:[%s166 + $0x18] sm:$0xff]
        %v193 = vld [vmem:[%s166 + $0x20] sm:$0xff]
        %v194 = vld [vmem:[%s166 + $0x28] sm:$0xff]
        %v195 = vld [vmem:[%s166 + $0x30] sm:$0xff]
        %v196 = vld [vmem:[%s166 + $0x38] sm:$0xff]
        %v197 = vadd.f32 %v189, %v190
        %198 = vadd.xlane.f32.xlu0 %v197
        %v199 = vpop.xlane.xlu0 %198
        %v200 = vadd.f32 %v191, %v192
        %201 = vadd.xlane.f32.xlu0 %v200
        %v202 = vpop.xlane.xlu0 %201
        %v203 = vadd.f32 %v193, %v194
        %204 = vadd.xlane.f32.xlu0 %v203
        %v205 = vpop.xlane.xlu0 %204
        %v206 = vadd.f32 %v195, %v196
        %207 = vadd.xlane.f32.xlu0 %v206
        %v208 = vpop.xlane.xlu0 %207
        %v209 = vrcp.pop 256.0
        %v210 = vmul.f32 %v199, %v209
        %v211 = vmul.f32 %v202, %v209
        %v212 = vmul.f32 %v205, %v209
        %v213 = vmul.f32 %v208, %v209
        %v214 = vld [vmem:[%s1] sm:$0xff]
        %v215 = vld [vmem:[%s1 + $0x8] sm:$0xff]
        %v216 = vld [vmem:[%s1 + $0x10] sm:$0xff]
        %v217 = vld [vmem:[%s1 + $0x18] sm:$0xff]
        %v222 = vlaneseq
        %v223 = vand.u32 %v222, 127
        %v224 = vlaneseq
        %v225 = vshrl.u32 %v224, 7
        %v226 = vsub.s32 %v223, %v225
        %v227 = vrot.slane %v210, %v226
        %v228 = vadd.s32 %v223, 4294967288
        %v229 = vlaneseq
        %v230 = vshrl.u32 %v229, 7
        %v231 = vsub.s32 %v228, %v230
        %v232 = vrot.slane %v211, %v231
        %vm233 = vcmask 130112
        %v234 = vsel %vm233, %v232, %v227
        %v235 = vadd.s32 %v223, 4294967280
        %v236 = vlaneseq
        %v237 = vshrl.u32 %v236, 7
        %v238 = vsub.s32 %v235, %v237
        %v239 = vrot.slane %v212, %v238
        %vm240 = vcmask 195712
        %v241 = vsel %vm240, %v239, %v234
        %v242 = vadd.s32 %v223, 4294967272
        %v243 = vlaneseq
        %v244 = vshrl.u32 %v243, 7
        %v245 = vsub.s32 %v242, %v244
        %v246 = vrot.slane %v213, %v245
        %vm247 = vcmask 261312
        %v248 = vsel %vm247, %v246, %v241
        %vm249 = vcmask 261120
        %v250 = vsel %vm249, %v248, 0
        %252 = vmatprep.subr.mxu0 0.0
        %253 = vmatpush1.msra.mxu0 %v214
        %254 = vmatprep.subr.mxu0 0.0
        %255 = vmatpush1.msra.mxu0 %v215
        %256 = vmatprep.subr.mxu0 0.0
        %257 = vmatpush1.msra.mxu0 %v216
        %258 = vmatprep.subr.mxu0 0.0
        %259 = vmatpush1.msra.mxu0 %v217
        %260 = vmatprep.subr.mxu0 0.0
        %261 = vmatpush1.msra.mxu0 0.0
        %262 = vmatprep.subr.mxu0 0.0
        %263 = vmatpush1.msra.mxu0 0.0
        %264 = vmatprep.subr.mxu0 0.0
        %265 = vmatpush1.msra.mxu0 0.0
        %266 = vmatprep.subr.mxu0 0.0
        %267 = vmatpush1.msra.mxu0 0.0
        %268 = vmatprep.subr.mxu0 0.0
        %269 = vmatpush1.msra.mxu0 0.0
        %270 = vmatprep.subr.mxu0 0.0
        %271 = vmatpush1.msra.mxu0 0.0
        %272 = vmatprep.subr.mxu0 0.0
        %273 = vmatpush1.msra.mxu0 0.0
        %274 = vmatprep.subr.mxu0 0.0
        %275 = vmatpush1.msra.mxu0 0.0
        %276 = vmatprep.subr.mxu0 0.0
        %277 = vmatpush1.msra.mxu0 0.0
        %278 = vmatprep.subr.mxu0 0.0
        %279 = vmatpush1.msra.mxu0 0.0
        %280 = vmatprep.subr.mxu0 0.0
        %281 = vmatpush1.msra.mxu0 0.0
        %282 = vmatprep.subr.mxu0 0.0
        %283 = vmatpush1.msra.mxu0 0.0
        %284 = vmatprep.subr.mxu0 0.0
        %285 = vmatpush1.msra.mxu0 0.0
        %286 = vmatprep.subr.mxu0 0.0
        %287 = vmatpush1.msra.mxu0 0.0
        %288 = vmatprep.subr.mxu0 0.0
        %289 = vmatpush1.msra.mxu0 0.0
        %290 = vmatprep.subr.mxu0 0.0
        %291 = vmatpush1.msra.mxu0 0.0
        %292 = vmatprep.subr.mxu0 0.0
        %293 = vmatpush1.msra.mxu0 0.0
        %294 = vmatprep.subr.mxu0 0.0
        %295 = vmatpush1.msra.mxu0 0.0
        %296 = vmatprep.subr.mxu0 0.0
        %297 = vmatpush1.msra.mxu0 0.0
        %298 = vmatprep.subr.mxu0 0.0
        %299 = vmatpush1.msra.mxu0 0.0
        %300 = vmatprep.subr.mxu0 0.0
        %301 = vmatpush1.msra.mxu0 0.0
        %302 = vmatprep.subr.mxu0 0.0
        %303 = vmatpush1.msra.mxu0 0.0
        %304 = vmatprep.subr.mxu0 0.0
        %305 = vmatpush1.msra.mxu0 0.0
        %306 = vmatprep.subr.mxu0 0.0
        %307 = vmatpush1.msra.mxu0 0.0
        %308 = vmatprep.subr.mxu0 0.0
        %309 = vmatpush1.msra.mxu0 0.0
        %310 = vmatprep.subr.mxu0 0.0
        %311 = vmatpush1.msra.mxu0 0.0
        %312 = vmatprep.subr.mxu0 0.0
        %313 = vmatpush1.msra.mxu0 0.0
        %314 = vmatprep.subr.mxu0 0.0
        %315 = vmatpush1.msra.mxu0 0.0
        %316 = vmatprep.mubr.f32.mxu0 0.0
        %317 = vmatmul.mubr.f32.gmra.mrb[0].mxu0 %v250
        %v318 = vpop.f32.mrb[0].mxu0
        %v319 = vadd.f32 0.0, %v318
        %v320 = vpop.f32.mrb[0].mxu0
        %321 = vdwg.mxu0
        %v322 = vmax.f32 %v319, 0.0
        %v323 = vld [vmem:[%s2] sm:$0x3]
        %vm324 = vcmask 15360
        %v326 = vsel %vm324, %v322, 0
        %vm328 = vcmask 1041408
        %v330 = vsel %vm328, %v323, 0
        %332 = vmatprep.subr.mxu0 0.0
        %333 = vmatpush1.msra.mxu0 %v330
        %334 = vmatprep.subr.mxu0 0.0
        %335 = vmatpush1.msra.mxu0 0.0
        %336 = vmatprep.subr.mxu0 0.0
        %337 = vmatpush1.msra.mxu0 0.0
        %338 = vmatprep.subr.mxu0 0.0
        %339 = vmatpush1.msra.mxu0 0.0
        %340 = vmatprep.subr.mxu0 0.0
        %341 = vmatpush1.msra.mxu0 0.0
        %342 = vmatprep.subr.mxu0 0.0
        %343 = vmatpush1.msra.mxu0 0.0
        %344 = vmatprep.subr.mxu0 0.0
        %345 = vmatpush1.msra.mxu0 0.0
        %346 = vmatprep.subr.mxu0 0.0
        %347 = vmatpush1.msra.mxu0 0.0
        %348 = vmatprep.subr.mxu0 0.0
        %349 = vmatpush1.msra.mxu0 0.0
        %350 = vmatprep.subr.mxu0 0.0
        %351 = vmatpush1.msra.mxu0 0.0
        %352 = vmatprep.subr.mxu0 0.0
        %353 = vmatpush1.msra.mxu0 0.0
        %354 = vmatprep.subr.mxu0 0.0
        %355 = vmatpush1.msra.mxu0 0.0
        %356 = vmatprep.subr.mxu0 0.0
        %357 = vmatpush1.msra.mxu0 0.0
        %358 = vmatprep.subr.mxu0 0.0
        %359 = vmatpush1.msra.mxu0 0.0
        %360 = vmatprep.subr.mxu0 0.0
        %361 = vmatpush1.msra.mxu0 0.0
        %362 = vmatprep.subr.mxu0 0.0
        %363 = vmatpush1.msra.mxu0 0.0
        %364 = vmatprep.subr.mxu0 0.0
        %365 = vmatpush1.msra.mxu0 0.0
        %366 = vmatprep.subr.mxu0 0.0
        %367 = vmatpush1.msra.mxu0 0.0
        %368 = vmatprep.subr.mxu0 0.0
        %369 = vmatpush1.msra.mxu0 0.0
        %370 = vmatprep.subr.mxu0 0.0
        %371 = vmatpush1.msra.mxu0 0.0
        %372 = vmatprep.subr.mxu0 0.0
        %373 = vmatpush1.msra.mxu0 0.0
        %374 = vmatprep.subr.mxu0 0.0
        %375 = vmatpush1.msra.mxu0 0.0
        %376 = vmatprep.subr.mxu0 0.0
        %377 = vmatpush1.msra.mxu0 0.0
        %378 = vmatprep.subr.mxu0 0.0
        %379 = vmatpush1.msra.mxu0 0.0
        %380 = vmatprep.subr.mxu0 0.0
        %381 = vmatpush1.msra.mxu0 0.0
        %382 = vmatprep.subr.mxu0 0.0
        %383 = vmatpush1.msra.mxu0 0.0
        %384 = vmatprep.subr.mxu0 0.0
        %385 = vmatpush1.msra.mxu0 0.0
        %386 = vmatprep.subr.mxu0 0.0
        %387 = vmatpush1.msra.mxu0 0.0
        %388 = vmatprep.subr.mxu0 0.0
        %389 = vmatpush1.msra.mxu0 0.0
        %390 = vmatprep.subr.mxu0 0.0
        %391 = vmatpush1.msra.mxu0 0.0
        %392 = vmatprep.subr.mxu0 0.0
        %393 = vmatpush1.msra.mxu0 0.0
        %394 = vmatprep.subr.mxu0 0.0
        %395 = vmatpush1.msra.mxu0 0.0
        %396 = vmatprep.mubr.f32.mxu0 0.0
        %397 = vmatmul.mubr.f32.gmra.mrb[0].mxu0 %v326
        %v398 = vpop.f32.mrb[0].mxu0
        %v399 = vadd.f32 0.0, %v398
        %v400 = vpop.f32.mrb[0].mxu0
        %401 = vdwg.mxu0
        %v402 = vxor.u32 %v399, 2147483648
        %v403 = vmul.f32 %v402, 1.442695
        %v404 = vpow.pop %v403
        %v405 = vadd.f32 %v404, 1.0
        %v406 = vrcp.pop %v405
        %v407 = vmul.f32 1.0, %v406
        %v408 = vlaneseq
        %v409 = vshrl.u32 %v408, 7
        %v410 = vsub.s32 0, %v409
        %v411 = vrot.slane %v407, %v410
        %413 = vbcast.lane.b32.xlu0 %v411, 256
        %v414 = vpop.permute.xlu0 %413
        %s416 = sor.u32 256, 8
        %417 = vbcast.lane.b32.xlu0 %v411, %s416
        %v418 = vpop.permute.xlu0 %417
        %s420 = sor.u32 256, 16
        %421 = vbcast.lane.b32.xlu0 %v411, %s420
        %v422 = vpop.permute.xlu0 %421
        %s424 = sor.u32 256, 24
        %425 = vbcast.lane.b32.xlu0 %v411, %s424
        %v426 = vpop.permute.xlu0 %425
        %v427 = vmul.f32 %v189, %v414
        %v428 = vmul.f32 %v190, %v414
        %v429 = vmul.f32 %v191, %v418
        %v430 = vmul.f32 %v192, %v418
        %v431 = vmul.f32 %v193, %v422
        %v432 = vmul.f32 %v194, %v422
        %v433 = vmul.f32 %v195, %v426
        %v434 = vmul.f32 %v196, %v426
        %435 = vst [vmem:[%s188] sm:$0xff] %v427
        %436 = vst [vmem:[%s188 + $0x8] sm:$0xff] %v428
        %437 = vst [vmem:[%s188 + $0x10] sm:$0xff] %v429
        %438 = vst [vmem:[%s188 + $0x18] sm:$0xff] %v430
        %439 = vst [vmem:[%s188 + $0x20] sm:$0xff] %v431
        %440 = vst [vmem:[%s188 + $0x28] sm:$0xff] %v432
        %441 = vst [vmem:[%s188 + $0x30] sm:$0xff] %v433
        %442 = vst [vmem:[%s188 + $0x38] sm:$0xff] %v434
        %s443 = sand.u32 %s96, 1
        %s444 = scalar_lea.sflag [#allocation4], %s443
        %s445 = sand.u32 %s96, 1
        %s446 = smul.addr %s445, 64
        %s447 = scalar_lea.vmem [#allocation5], %s446
        // Predicated region
        $region37: #{tpu_custom_call.1} parent=31 // pred_check
          %p448 = pneg %p106
        $region38: #{tpu_custom_call.1} parent=31 // pred_check_branch
          %450 = sbr.rel (%p448) target = $region40
        $region39: #{tpu_custom_call.1} parent=31 // pred_region
          %s452 = ssub.s32 1024, 1024
          %453 = vsyncadd %s444, %s452
          %s454 = smul.addr %s20, 8
          %s455 = smul.addr %s454, 128
          %s456 = scalar_lea.hbm %s3, %s455
          %s457 = sshll.u32 %s447, 4
          %s458 = int_to_ptr.vmem [resolvable:$true] %s457
          %463 = dma.vmem_to_hbm [thread:$0]  %s458, 1024, %s456, %s444, 256, 256, 16
        $region40: #{tpu_custom_call.1} parent=31 // pred_fallthru
          _
      $region32: #{tpu_custom_call.1} parent=5 // pred_fallthru
        _
      %p464 = scmp.le.s32.totalorder 2, %s15
      // Predicated region
      $region41: #{tpu_custom_call.1} parent=5 // pred_check
        %p465 = pneg %p464
      $region42: #{tpu_custom_call.1} parent=5 // pred_check_branch
        %467 = sbr.rel (%p465) target = $region44
      $region43: #{tpu_custom_call.1} parent=5 // pred_region
        %s468 = ssub.s32 %s15, 2
        // Predicated region
        $region45: #{tpu_custom_call.1} parent=43 // pred_check
          %p469 = pneg %p112
        $region46: #{tpu_custom_call.1} parent=43 // pred_check_branch
          %471 = sbr.rel (%p469) target = $region48
        $region47: #{tpu_custom_call.1} parent=43 // pred_region
          %s472 = sand.u32 %s97, 1
          %s473 = scalar_lea.sflag [#allocation4], %s472
          %s474 = sand.u32 %s97, 1
          %s475 = smul.addr %s474, 64
          %s476 = scalar_lea.vmem [#allocation5], %s475
          %477 = dma.done %s473, 1024
        $region48: #{tpu_custom_call.1} parent=43 // pred_fallthru
          _
      $region44: #{tpu_custom_call.1} parent=5 // pred_fallthru
        _
    $region6: #{tpu_custom_call.1} parent=1 // loop_footer
      %s19 = sadd.s32 1, %s15
    $region7: #{tpu_custom_call.1} parent=1 // loop_footer_branch
      %14 = sbr.rel target = $region3
    $region8: #{tpu_custom_call.1} parent=1 // loop_exit
      _
    %478 = vsyncpa [#allocation3], 1
    %s479 = scalar_lea.sflag [#allocation3], 1
    %480 = vsyncpa %s479, 1
    %481 = vsyncpa [#allocation4], 1
    %s482 = scalar_lea.sflag [#allocation4], 1
    %483 = vsyncpa %s482, 1

</llo_original>
